<compile_context>
chip_gen: v6e
topology: v6e:2x2x1
jax: 0.10.0
libtpu: 0.0.40
codegen_flags: <defaults>
</compile_context>

<pallas_src>
import jax
import jax.numpy as jnp
from jax import lax
from jax.experimental import pallas as pl
from jax.experimental.pallas import tpu as pltpu


def _affine_kernel(x_ref, scale_ref, bias_ref, o_ref):
    # x_ref:               (row_block, col_block)  lane-dense image tile
    # scale_ref/bias_ref:  (row_block, 1)          per-row affine params (broadcast over lanes)
    o_ref[...] = x_ref[...] * scale_ref[...] + bias_ref[...]


def _round_up(x, m):
    return ((x + m - 1) // m) * m


# ~2 MiB f32 tile target (amortizes the ~0.35 us per-grid-step overhead while
# keeping double-buffered in+out under the v5e 16 MiB scoped-VMEM default).
_TILE_BYTES = 2 * 1024 * 1024


def _normalize_pallas(img, mean, std):
    """(img - mean[c]) / std[c] for NCHW img, as a lane/sublane-dense Pallas kernel."""
    N, C, H, W = img.shape
    rows, cols = N * C, H * W

    # ---- tile geometry -----------------------------------------------------
    cols_p_full = _round_up(cols, 128)
    # Column block: full lane extent when it fits the tile budget at 8 rows,
    # otherwise cap it (multiple of 128) so huge images still tile into VMEM.
    max_col_block = max(128, (_TILE_BYTES // (8 * 4)) // 128 * 128)
    col_block = min(cols_p_full, max_col_block)
    cols_p = _round_up(cols_p_full, col_block)

    # Row block: fill the remaining tile budget, multiple of 8 sublanes.
    target_rows = max(8, (_TILE_BYTES // (col_block * 4)) // 8 * 8)
    row_block = min(_round_up(rows, 8), target_rows)
    rows_p = _round_up(rows, row_block)

    # ---- operands ------------------------------------------------------------
    x2d = img.astype(jnp.float32).reshape(rows, cols)
    if (rows_p, cols_p) != (rows, cols):
        x2d = jnp.pad(x2d, ((0, rows_p - rows), (0, cols_p - cols)))

    # Fold (x - mean) / std into x * scale + bias, laid out per flattened row
    # (row r of the 2-D view corresponds to channel r % C).
    scale_c = (1.0 / std).astype(jnp.float32)          # (C,)
    bias_c = (-mean / std).astype(jnp.float32)         # (C,)
    row_scale = jnp.tile(scale_c, N)                   # (N*C,)
    row_bias = jnp.tile(bias_c, N)
    if rows_p != rows:
        row_scale = jnp.pad(row_scale, (0, rows_p - rows))
        row_bias = jnp.pad(row_bias, (0, rows_p - rows))
    row_scale = row_scale.reshape(rows_p, 1)
    row_bias = row_bias.reshape(rows_p, 1)

    grid = (rows_p // row_block, cols_p // col_block)

    out = pl.pallas_call(
        _affine_kernel,
        out_shape=jax.ShapeDtypeStruct((rows_p, cols_p), jnp.float32),
        grid=grid,
        in_specs=[
            pl.BlockSpec((row_block, col_block), lambda r, c: (r, c)),
            pl.BlockSpec((row_block, 1), lambda r, c: (r, 0)),
            pl.BlockSpec((row_block, 1), lambda r, c: (r, 0)),
        ],
        out_specs=pl.BlockSpec((row_block, col_block), lambda r, c: (r, c)),
        input_output_aliases={0: 0},   # elementwise -> donate the image buffer
        compiler_params=pltpu.CompilerParams(
            dimension_semantics=("parallel", "parallel")),
    )(x2d, row_scale, row_bias)

    if (rows_p, cols_p) != (rows, cols):
        out = out[:rows, :cols]
    return out.reshape(N, C, H, W)


def conditional_transform(img, mean, std, *, t_is_none=False,
                          static_condition=True, condition=True):
    """JAX/Pallas equivalent of ConditionalTransform.forward.

    img:  (N, C, H, W) float32
    mean: (C,), std: (C,)  -- parameters of the wrapped transform t
    t_is_none / static_condition: the Python-level parts of the predicate
    condition: runtime flag (Python bool or traced/array scalar)
    """
    # Static short-circuit: `self.t and self.condition` in PyTorch.
    if t_is_none or not static_condition:
        return img

    run = lambda im: _normalize_pallas(im, mean, std)

    # Runtime `condition`: static bools short-circuit; traced values use
    # lax.cond so the False path skips the full HBM read+write of the kernel.
    if isinstance(condition, (bool, int)):
        return run(img) if condition else img
    pred = jnp.asarray(condition, dtype=jnp.bool_)
    return lax.cond(pred, run, lambda im: im.astype(jnp.float32), img)


if __name__ == "__main__":
    key = jax.random.PRNGKey(0)
    N, C, H, W = 2, 4, 16, 16
    img = jax.random.normal(key, (N, C, H, W), dtype=jnp.float32)

    # Deterministic "parameters" of the wrapped transform t.
    mean = jnp.arange(C, dtype=jnp.float32) * 0.1          # [0.0, 0.1, 0.2, 0.3]
    std = jnp.arange(1, C + 1, dtype=jnp.float32) * 0.5    # [0.5, 1.0, 1.5, 2.0]

    # Static condition paths.
    out_true = conditional_transform(img, mean, std, condition=True)
    out_false = conditional_transform(img, mean, std, condition=False)
    out_none = conditional_transform(img, mean, std, t_is_none=True, condition=True)
    # Dynamic (array) condition paths -> lax.cond around the kernel.
    out_dyn_t = conditional_transform(img, mean, std, condition=jnp.asarray(True))
    out_dyn_f = conditional_transform(img, mean, std, condition=jnp.asarray(False))

    jax.block_until_ready((out_true, out_false, out_none, out_dyn_t, out_dyn_f))

    # Reference checks (pure JAX).
    ref = (img - mean.reshape(1, C, 1, 1)) / std.reshape(1, C, 1, 1)
    assert jnp.allclose(out_true, ref, atol=1e-5, rtol=1e-5)
    assert jnp.allclose(out_dyn_t, ref, atol=1e-5, rtol=1e-5)
    assert jnp.allclose(out_false, img)
    assert jnp.allclose(out_dyn_f, img)
    assert jnp.allclose(out_none, img)

    print("KERNEL_OK")
</pallas_src>

<mosaic_0001>
module attributes {stable_mosaic.version = 11 : i64} {
  func.func @_affine_kernel(%arg0: i32, %arg1: i32, %arg2: memref<8x256xf32, #tpu.memory_space<vmem>>, %arg3: memref<8x1xf32, #tpu.memory_space<vmem>>, %arg4: memref<8x1xf32, #tpu.memory_space<vmem>>, %arg5: memref<8x256xf32, #tpu.memory_space<vmem>>) attributes {dimension_semantics = [#tpu.dimension_semantics<parallel>, #tpu.dimension_semantics<parallel>], iteration_bounds = array<i64: 1, 1>, scalar_prefetch = 0 : i64, scratch_operands = 0 : i64, tpu.core_type = #tpu.core_type<tc>, window_params = [{transform_indices = @transform_0, window_bounds = array<i64: 8, 256>}, {transform_indices = @transform_1, window_bounds = array<i64: 8, 1>}, {transform_indices = @transform_2, window_bounds = array<i64: 8, 1>}, {transform_indices = @transform_3, window_bounds = array<i64: 8, 256>}]} {
    %c0 = arith.constant 0 : index
    %c0_0 = arith.constant 0 : index
    %0 = vector.load %arg2[%c0, %c0_0] : memref<8x256xf32, #tpu.memory_space<vmem>>, vector<8x256xf32>
    %c0_1 = arith.constant 0 : index
    %c0_2 = arith.constant 0 : index
    %1 = vector.load %arg3[%c0_1, %c0_2] : memref<8x1xf32, #tpu.memory_space<vmem>>, vector<8x1xf32>
    %2 = vector.broadcast %1 : vector<8x1xf32> to vector<8x256xf32>
    %3 = arith.mulf %0, %2 : vector<8x256xf32>
    %c0_3 = arith.constant 0 : index
    %c0_4 = arith.constant 0 : index
    %4 = vector.load %arg4[%c0_3, %c0_4] : memref<8x1xf32, #tpu.memory_space<vmem>>, vector<8x1xf32>
    %5 = vector.broadcast %4 : vector<8x1xf32> to vector<8x256xf32>
    %6 = arith.addf %3, %5 : vector<8x256xf32>
    %c0_5 = arith.constant 0 : index
    %c0_6 = arith.constant 0 : index
    %7 = vector.load %arg5[%c0_5, %c0_6] : memref<8x256xf32, #tpu.memory_space<vmem>>, vector<8x256xf32>
    tpu.vector_store %arg5[%c0_5, %c0_6], %6 {strides = array<i32>} : memref<8x256xf32, #tpu.memory_space<vmem>>, vector<8x256xf32>,
    return
  }
  func.func @transform_0(%arg0: i32, %arg1: i32) -> (i32, i32) {
    %c0_i32 = arith.constant 0 : i32
    return %arg0, %arg1 : i32, i32
  }
  func.func @transform_1(%arg0: i32, %arg1: i32) -> (i32, i32) {
    %c0_i32 = arith.constant 0 : i32
    %c0_i32_0 = arith.constant 0 : i32
    return %arg0, %c0_i32 : i32, i32
  }
  func.func @transform_2(%arg0: i32, %arg1: i32) -> (i32, i32) {
    %c0_i32 = arith.constant 0 : i32
    %c0_i32_0 = arith.constant 0 : i32
    return %arg0, %c0_i32 : i32, i32
  }
  func.func @transform_3(%arg0: i32, %arg1: i32) -> (i32, i32) {
    %c0_i32 = arith.constant 0 : i32
    return %arg0, %arg1 : i32, i32
  }
}

</mosaic_0001>

<llo_original>
// kernel: tpu_custom_call.1
$region0: #{tpu_custom_call.1}
  #allocation0 [shape = 'u32[]', space=smem, size = 0x4, offset = 0x4, fixed_abs, tag = 'smem constant byte address 0x4 - core index']
  #allocation1 [shape = 'u32[144,128]{1,0:T(1,128)}', space=vmem, size = 0x12000, scoped, tag = 'internal scratch']
  %s0 = inlined_call_operand.hbm [shape: f32[8,256], index: 0, kind: input, shape index: {}, may-alias: {0,3}]
  %s1 = inlined_call_operand.vmem [shape: f32[8,1], index: 1, kind: input, shape index: {}]
  %s2 = inlined_call_operand.vmem [shape: f32[8,1], index: 2, kind: input, shape index: {}]
  %s3 = inlined_call_operand.hbm [shape: f32[8,256], index: 3, kind: output, shape index: {}, may-alias: {0,3}]
  %s4 = sld [smem:[#allocation0]]
  $region26: #{tpu_custom_call.1} parent=0
    _
  %s6 = ssub.s32 1, %s4
  %s7 = scalar_select 0, %s6, %s4
  $region1: #{tpu_custom_call.1} parent=0
    #allocation2 [shape = 'u8[8192]{0}', space=vmem, size = 0x2000, scoped, tag = 'input window, operand 0, single buffered']
    #allocation3 [shape = 's32[1]{0}', space=sflag, size = 0x4, scoped, tag = 'scoped memory for tpu_custom_call.1']
    #allocation4 [shape = 's32[1]{0}', space=sflag, size = 0x4, scoped, tag = 'scoped memory for tpu_custom_call.1']
    #allocation5 [shape = 'u8[8192]{0}', space=vmem, size = 0x2000, scoped, tag = 'output window, operand 0, single buffered']
    %8 = vsyncpa [#allocation3], 0
    %9 = vsyncpa [#allocation4], 0
    // Predicated region
    $region2: #{tpu_custom_call.1} parent=1 // pred_check
      _
    $region3: #{tpu_custom_call.1} parent=1 // pred_check_branch
      %11 = sbr.rel (0) target = $region5
    $region4: #{tpu_custom_call.1} parent=1 // pred_region
      %s13 = ssub.s32 256, 256
      %14 = vsyncadd [#allocation3], %s13
      %s16 = sshll.u32 [#allocation2], 4
      %s17 = int_to_ptr.vmem [resolvable:$true] %s16
      %19 = dma.hbm_to_vmem [thread:$0]  %s0, 256, %s17, [#allocation3]
    $region5: #{tpu_custom_call.1} parent=1 // pred_fallthru
      _
    // Predicated region
    $region6: #{tpu_custom_call.1} parent=1 // pred_check
      _
    $region7: #{tpu_custom_call.1} parent=1 // pred_check_branch
      %21 = sbr.rel (0) target = $region9
    $region8: #{tpu_custom_call.1} parent=1 // pred_region
      _
    $region9: #{tpu_custom_call.1} parent=1 // pred_fallthru
      _
    // Predicated region
    $region10: #{tpu_custom_call.1} parent=1 // pred_check
      _
    $region11: #{tpu_custom_call.1} parent=1 // pred_check_branch
      %23 = sbr.rel (0) target = $region13
    $region12: #{tpu_custom_call.1} parent=1 // pred_region
      _
    $region13: #{tpu_custom_call.1} parent=1 // pred_fallthru
      _
    // Predicated region
    $region14: #{tpu_custom_call.1} parent=1 // pred_check
      _
    $region15: #{tpu_custom_call.1} parent=1 // pred_check_branch
      %25 = sbr.rel (0) target = $region17
    $region16: #{tpu_custom_call.1} parent=1 // pred_region
      %26 = dma.done [#allocation3], 256
    $region17: #{tpu_custom_call.1} parent=1 // pred_fallthru
      _
    %v27 = vld [vmem:[#allocation2] sm:$0xff]
    %v28 = vld [vmem:[#allocation2 + $0x8] sm:$0xff]
    %v29 = vld [vmem:[%s1] sm:$0xff]
    %31 = vset.pattern.permute.xlu0 0
    %32 = vperm.xlu0 %31, %v29
    %v33 = vpop.permute.xlu0 %32
    %v35 = vmul.f32 %v27, %v33
    %v36 = vmul.f32 %v28, %v33
    %v37 = vld [vmem:[%s2] sm:$0xff]
    %39 = vset.pattern.permute.xlu0 0
    %40 = vperm.xlu0 %39, %v37
    %v41 = vpop.permute.xlu0 %40
    %v43 = vadd.f32 %v35, %v41
    %v44 = vadd.f32 %v36, %v41
    %45 = vst [vmem:[#allocation5] sm:$0xff] %v43
    %46 = vst [vmem:[#allocation5 + $0x8] sm:$0xff] %v44
    // Predicated region
    $region18: #{tpu_custom_call.1} parent=1 // pred_check
      _
    $region19: #{tpu_custom_call.1} parent=1 // pred_check_branch
      %48 = sbr.rel (0) target = $region21
    $region20: #{tpu_custom_call.1} parent=1 // pred_region
      %s50 = ssub.s32 256, 256
      %51 = vsyncadd [#allocation4], %s50
      %s53 = sshll.u32 [#allocation5], 4
      %s54 = int_to_ptr.vmem [resolvable:$true] %s53
      %56 = dma.vmem_to_hbm [thread:$0]  %s54, 256, %s3, [#allocation4]
    $region21: #{tpu_custom_call.1} parent=1 // pred_fallthru
      _
    // Predicated region
    $region22: #{tpu_custom_call.1} parent=1 // pred_check
      _
    $region23: #{tpu_custom_call.1} parent=1 // pred_check_branch
      %58 = sbr.rel (0) target = $region25
    $region24: #{tpu_custom_call.1} parent=1 // pred_region
      %59 = dma.done [#allocation4], 256
    $region25: #{tpu_custom_call.1} parent=1 // pred_fallthru
      _
    %60 = vsyncpa [#allocation3], 1
    %61 = vsyncpa [#allocation4], 1

</llo_original>
